<compile_context>
chip_gen: v6e
topology: v6e:2x2x1
jax: 0.10.0
libtpu: 0.0.40
codegen_flags: <defaults>
</compile_context>

<pallas_src>
import jax
import jax.numpy as jnp
from jax.experimental import pallas as pl
from jax.experimental.pallas import tpu as pltpu


def _downsample_kernel(w_ref, b_ref, m_ref, o_ref):
    # w_ref: (C_out, K)   flattened 1x1-conv weight, K = 4*C_in (order: c, ph, pw)
    # b_ref: (C_out, 1)   conv bias
    # m_ref: (K, TN)      space-to-depth input columns (TN spatial positions)
    # o_ref: (C_out, TN)
    acc = jnp.dot(w_ref[...], m_ref[...], preferred_element_type=jnp.float32)
    o_ref[...] = (acc + b_ref[...]).astype(o_ref.dtype)


def downsample(x, conv_weight, conv_bias):
    """Downsample forward.

    x:           (B, C, H, W)  float32, H and W even
    conv_weight: (C, 4*C)      1x1-conv weight (PyTorch (C, 4C, 1, 1) squeezed)
    conv_bias:   (C,)
    returns:     (B, C, H//2, W//2) float32
    """
    B, C, H, W = x.shape
    assert H % 2 == 0 and W % 2 == 0, "spatial dims must be even"
    h, w = H // 2, W // 2
    C_out = conv_weight.shape[0]
    K = 4 * C
    N = B * h * w

    # --- Rearrange 'b c (h ph) (w pw) -> (c ph pw) (b h w)'  (layout plumbing) ---
    # M[c*4 + ph*2 + pw, b*h*w + h_*w + w_] = x[b, c, 2*h_+ph, 2*w_+pw]
    m = (x.astype(jnp.float32)
         .reshape(B, C, h, 2, w, 2)      # (b, c, h, ph, w, pw)
         .transpose(1, 3, 5, 0, 2, 4)    # (c, ph, pw, b, h, w)
         .reshape(K, N))

    w2d = conv_weight.reshape(C_out, K).astype(jnp.float32)
    b2d = conv_bias.reshape(C_out, 1).astype(jnp.float32)

    # Lane tile over spatial positions: full-dim block when it fits, otherwise
    # a lane-dense multiple of 128 (last block masked automatically).
    if N <= 1024:
        tn = N
    else:
        tn = 1024
    grid = (pl.cdiv(N, tn),)

    cost = pl.CostEstimate(
        flops=2 * C_out * K * N,
        transcendentals=0,
        bytes_accessed=4 * (C_out * K + C_out + K * N + C_out * N),
    )

    out2d = pl.pallas_call(
        _downsample_kernel,
        out_shape=jax.ShapeDtypeStruct((C_out, N), jnp.float32),
        grid=grid,
        in_specs=[
            pl.BlockSpec((C_out, K), lambda n: (0, 0)),   # weight: resident
            pl.BlockSpec((C_out, 1), lambda n: (0, 0)),   # bias:   resident
            pl.BlockSpec((K, tn), lambda n: (0, n)),      # input columns
        ],
        out_specs=pl.BlockSpec((C_out, tn), lambda n: (0, n)),
        compiler_params=pltpu.CompilerParams(
            dimension_semantics=("parallel",)),
        cost_estimate=cost,
    )(w2d, b2d, m)

    # (C_out, B*h*w) -> (B, C_out, h, w)   (matches PyTorch NCHW output)
    return out2d.reshape(C_out, B, h, w).transpose(1, 0, 2, 3)


def _reference(x, conv_weight, conv_bias):
    B, C, H, W = x.shape
    h, w = H // 2, W // 2
    # Rearrange 'b c (h ph) (w pw) -> b (c ph pw) h w'
    y = (x.reshape(B, C, h, 2, w, 2)
          .transpose(0, 1, 3, 5, 2, 4)
          .reshape(B, 4 * C, h, w))
    out = jnp.einsum("oc,bchw->bohw", conv_weight, y,
                     preferred_element_type=jnp.float32)
    return out + conv_bias[None, :, None, None]


if __name__ == "__main__":
    B, C, H, W = 2, 4, 16, 16          # small shapes consistent with the module

    key = jax.random.PRNGKey(0)
    k_x, k_w, k_b = jax.random.split(key, 3)

    x = jax.random.normal(k_x, (B, C, H, W), dtype=jnp.float32)
    conv_weight = jax.random.normal(k_w, (C, 4 * C), dtype=jnp.float32) * 0.1
    conv_bias = jax.random.normal(k_b, (C,), dtype=jnp.float32) * 0.1

    out = downsample(x, conv_weight, conv_bias)
    out = jax.block_until_ready(out)

    ref = _reference(x, conv_weight, conv_bias)
    assert out.shape == (B, C, H // 2, W // 2), out.shape
    assert jnp.allclose(out, ref, atol=1e-3, rtol=1e-3), float(
        jnp.max(jnp.abs(out - ref)))

    print("KERNEL_OK")
</pallas_src>

<mosaic_0001>
module attributes {stable_mosaic.version = 11 : i64} {
  func.func @_downsample_kernel(%arg0: i32, %arg1: memref<4x16xf32, #tpu.memory_space<vmem>>, %arg2: memref<4x1xf32, #tpu.memory_space<vmem>>, %arg3: memref<16x128xf32, #tpu.memory_space<vmem>>, %arg4: memref<4x128xf32, #tpu.memory_space<vmem>>) attributes {dimension_semantics = [#tpu.dimension_semantics<parallel>], iteration_bounds = array<i64: 1>, scalar_prefetch = 0 : i64, scratch_operands = 0 : i64, tpu.core_type = #tpu.core_type<tc>, window_params = [{pipeline_mode = #tpu.pipeline_mode<synchronous>, transform_indices = @transform_0, window_bounds = array<i64: 4, 16>}, {pipeline_mode = #tpu.pipeline_mode<synchronous>, transform_indices = @transform_1, window_bounds = array<i64: 4, 1>}, {transform_indices = @transform_2, window_bounds = array<i64: 16, 128>}, {transform_indices = @transform_3, window_bounds = array<i64: 4, 128>}]} {
    %c0 = arith.constant 0 : index
    %c0_0 = arith.constant 0 : index
    %0 = vector.load %arg1[%c0, %c0_0] : memref<4x16xf32, #tpu.memory_space<vmem>>, vector<4x16xf32>
    %c0_1 = arith.constant 0 : index
    %c0_2 = arith.constant 0 : index
    %1 = vector.load %arg3[%c0_1, %c0_2] : memref<16x128xf32, #tpu.memory_space<vmem>>, vector<16x128xf32>
    %cst = arith.constant dense<0.000000e+00> : vector<4x128xf32>
    %2 = tpu.matmul %0, %1, %cst {dimension_numbers = #tpu.dot_dimension_numbers<[1], [0], [0], [1], [0, 0, 1, 1], [], []>} : vector<4x16xf32>, vector<16x128xf32>, vector<4x128xf32> -> vector<4x128xf32>
    %c0_3 = arith.constant 0 : index
    %c0_4 = arith.constant 0 : index
    %3 = vector.load %arg2[%c0_3, %c0_4] : memref<4x1xf32, #tpu.memory_space<vmem>>, vector<4x1xf32>
    %4 = vector.broadcast %3 : vector<4x1xf32> to vector<4x128xf32>
    %5 = arith.addf %2, %4 : vector<4x128xf32>
    %c0_5 = arith.constant 0 : index
    %c0_6 = arith.constant 0 : index
    %6 = vector.load %arg4[%c0_5, %c0_6] : memref<4x128xf32, #tpu.memory_space<vmem>>, vector<4x128xf32>
    tpu.vector_store %arg4[%c0_5, %c0_6], %5 {strides = array<i32>} : memref<4x128xf32, #tpu.memory_space<vmem>>, vector<4x128xf32>,
    return
  }
  func.func @transform_0(%arg0: i32) -> (i32, i32) {
    %c0_i32 = arith.constant 0 : i32
    %c0_i32_0 = arith.constant 0 : i32
    %c0_i32_1 = arith.constant 0 : i32
    return %c0_i32, %c0_i32_0 : i32, i32
  }
  func.func @transform_1(%arg0: i32) -> (i32, i32) {
    %c0_i32 = arith.constant 0 : i32
    %c0_i32_0 = arith.constant 0 : i32
    %c0_i32_1 = arith.constant 0 : i32
    return %c0_i32, %c0_i32_0 : i32, i32
  }
  func.func @transform_2(%arg0: i32) -> (i32, i32) {
    %c0_i32 = arith.constant 0 : i32
    %c0_i32_0 = arith.constant 0 : i32
    return %c0_i32, %arg0 : i32, i32
  }
  func.func @transform_3(%arg0: i32) -> (i32, i32) {
    %c0_i32 = arith.constant 0 : i32
    %c0_i32_0 = arith.constant 0 : i32
    return %c0_i32, %arg0 : i32, i32
  }
}

</mosaic_0001>

<llo_original>
// kernel: tpu_custom_call.1
$region0: #{tpu_custom_call.1}
  #allocation0 [shape = 'u32[]', space=smem, size = 0x4, offset = 0x4, fixed_abs, tag = 'smem constant byte address 0x4 - core index']
  #allocation1 [shape = 'u32[144,128]{1,0:T(1,128)}', space=vmem, size = 0x12000, scoped, tag = 'internal scratch']
  %s0 = inlined_call_operand.vmem [shape: f32[4,16], index: 0, kind: input, shape index: {}]
  %s1 = inlined_call_operand.vmem [shape: f32[4,1], index: 1, kind: input, shape index: {}]
  %s2 = inlined_call_operand.hbm [shape: f32[16,128], index: 2, kind: input, shape index: {}]
  %s3 = inlined_call_operand.hbm [shape: f32[4,128], index: 3, kind: output, shape index: {}]
  %s4 = sld [smem:[#allocation0]]
  $region26: #{tpu_custom_call.1} parent=0
    _
  %s6 = ssub.s32 1, %s4
  %s7 = scalar_select 0, %s6, %s4
  $region1: #{tpu_custom_call.1} parent=0
    #allocation2 [shape = 'u8[8192]{0}', space=vmem, size = 0x2000, scoped, tag = 'input window, operand 2, single buffered']
    #allocation3 [shape = 's32[1]{0}', space=sflag, size = 0x4, scoped, tag = 'scoped memory for tpu_custom_call.1']
    #allocation4 [shape = 's32[1]{0}', space=sflag, size = 0x4, scoped, tag = 'scoped memory for tpu_custom_call.1']
    #allocation5 [shape = 'u8[2048]{0}', space=vmem, size = 0x800, scoped, tag = 'output window, operand 0, single buffered']
    %8 = vsyncpa [#allocation3], 0
    %9 = vsyncpa [#allocation4], 0
    // Predicated region
    $region2: #{tpu_custom_call.1} parent=1 // pred_check
      _
    $region3: #{tpu_custom_call.1} parent=1 // pred_check_branch
      %11 = sbr.rel (0) target = $region5
    $region4: #{tpu_custom_call.1} parent=1 // pred_region
      _
    $region5: #{tpu_custom_call.1} parent=1 // pred_fallthru
      _
    // Predicated region
    $region6: #{tpu_custom_call.1} parent=1 // pred_check
      _
    $region7: #{tpu_custom_call.1} parent=1 // pred_check_branch
      %13 = sbr.rel (0) target = $region9
    $region8: #{tpu_custom_call.1} parent=1 // pred_region
      _
    $region9: #{tpu_custom_call.1} parent=1 // pred_fallthru
      _
    // Predicated region
    $region10: #{tpu_custom_call.1} parent=1 // pred_check
      _
    $region11: #{tpu_custom_call.1} parent=1 // pred_check_branch
      %15 = sbr.rel (0) target = $region13
    $region12: #{tpu_custom_call.1} parent=1 // pred_region
      %s17 = ssub.s32 256, 256
      %18 = vsyncadd [#allocation3], %s17
      %s19 = sshll.u32 [#allocation2], 4
      %s20 = int_to_ptr.vmem [resolvable:$true] %s19
      %25 = dma.hbm_to_vmem [thread:$0]  %s2, 256, %s20, [#allocation3], 128, 128, 8
    $region13: #{tpu_custom_call.1} parent=1 // pred_fallthru
      _
    // Predicated region
    $region14: #{tpu_custom_call.1} parent=1 // pred_check
      _
    $region15: #{tpu_custom_call.1} parent=1 // pred_check_branch
      %27 = sbr.rel (0) target = $region17
    $region16: #{tpu_custom_call.1} parent=1 // pred_region
      %28 = dma.done [#allocation3], 256
    $region17: #{tpu_custom_call.1} parent=1 // pred_fallthru
      _
    %v29 = vld [vmem:[%s0] sm:$0xf]
    %v30 = vld [vmem:[#allocation2] sm:$0xff]
    %v31 = vld [vmem:[#allocation2 + $0x8] sm:$0xff]
    %v32 = vld [vmem:[%s1] sm:$0xf]
    %34 = vset.pattern.permute.xlu0 0
    %35 = vperm.xlu0 %34, %v32
    %v36 = vpop.permute.xlu0 %35
    %vm38 = vcmask 130048
    %v40 = vsel %vm38, %v29, 0
    %42 = vmatprep.subr.mxu0 0.0
    %43 = vmatpush1.msra.mxu0 0.0
    %44 = vmatprep.subr.mxu0 0.0
    %45 = vmatpush1.msra.mxu0 0.0
    %46 = vmatprep.subr.mxu0 0.0
    %47 = vmatpush1.msra.mxu0 0.0
    %48 = vmatprep.subr.mxu0 0.0
    %49 = vmatpush1.msra.mxu0 0.0
    %50 = vmatprep.subr.mxu0 0.0
    %51 = vmatpush1.msra.mxu0 0.0
    %52 = vmatprep.subr.mxu0 0.0
    %53 = vmatpush1.msra.mxu0 0.0
    %54 = vmatprep.subr.mxu0 0.0
    %55 = vmatpush1.msra.mxu0 0.0
    %56 = vmatprep.subr.mxu0 0.0
    %57 = vmatpush1.msra.mxu0 0.0
    %58 = vmatprep.subr.mxu0 0.0
    %59 = vmatpush1.msra.mxu0 0.0
    %60 = vmatprep.subr.mxu0 0.0
    %61 = vmatpush1.msra.mxu0 0.0
    %62 = vmatprep.subr.mxu0 0.0
    %63 = vmatpush1.msra.mxu0 0.0
    %64 = vmatprep.subr.mxu0 0.0
    %65 = vmatpush1.msra.mxu0 0.0
    %66 = vmatprep.subr.mxu0 0.0
    %67 = vmatpush1.msra.mxu0 0.0
    %68 = vmatprep.subr.mxu0 0.0
    %69 = vmatpush1.msra.mxu0 0.0
    %70 = vmatprep.subr.mxu0 0.0
    %71 = vmatpush1.msra.mxu0 %v31
    %72 = vmatprep.subr.mxu0 0.0
    %73 = vmatpush1.msra.mxu0 %v30
    %74 = vmatprep.subr.mxu0 0.0
    %75 = vmatpush2.msra.mxu0 0.0
    %76 = vmatprep.subr.mxu0 0.0
    %77 = vmatpush2.msra.mxu0 0.0
    %78 = vmatprep.subr.mxu0 0.0
    %79 = vmatpush2.msra.mxu0 0.0
    %80 = vmatprep.subr.mxu0 0.0
    %81 = vmatpush2.msra.mxu0 0.0
    %82 = vmatprep.subr.mxu0 0.0
    %83 = vmatpush2.msra.mxu0 0.0
    %84 = vmatprep.subr.mxu0 0.0
    %85 = vmatpush2.msra.mxu0 0.0
    %86 = vmatprep.subr.mxu0 0.0
    %87 = vmatpush2.msra.mxu0 0.0
    %88 = vmatprep.subr.mxu0 0.0
    %89 = vmatpush2.msra.mxu0 0.0
    %90 = vmatprep.subr.mxu0 0.0
    %91 = vmatpush2.msra.mxu0 0.0
    %92 = vmatprep.subr.mxu0 0.0
    %93 = vmatpush2.msra.mxu0 0.0
    %94 = vmatprep.subr.mxu0 0.0
    %95 = vmatpush2.msra.mxu0 0.0
    %96 = vmatprep.subr.mxu0 0.0
    %97 = vmatpush2.msra.mxu0 0.0
    %98 = vmatprep.subr.mxu0 0.0
    %99 = vmatpush2.msra.mxu0 0.0
    %100 = vmatprep.subr.mxu0 0.0
    %101 = vmatpush2.msra.mxu0 0.0
    %102 = vmatprep.subr.mxu0 0.0
    %103 = vmatpush2.msra.mxu0 0.0
    %104 = vmatprep.subr.mxu0 0.0
    %105 = vmatpush2.msra.mxu0 0.0
    %106 = vmatprep.mubr.f32.mxu0 0.0
    %107 = vmatmul.mubr.f32.gmra.mxu0 %v40
    %v108 = vpop.f32.mrf.mxu0
    %v109 = vadd.f32 %v36, %v108
    %v110 = vpop.f32.mrf.mxu0
    %111 = vdwg.mxu0
    %112 = vst [vmem:[#allocation5] sm:$0xf] %v109
    // Predicated region
    $region18: #{tpu_custom_call.1} parent=1 // pred_check
      _
    $region19: #{tpu_custom_call.1} parent=1 // pred_check_branch
      %114 = sbr.rel (0) target = $region21
    $region20: #{tpu_custom_call.1} parent=1 // pred_region
      %s116 = ssub.s32 64, 64
      %117 = vsyncadd [#allocation4], %s116
      %s119 = sshll.u32 [#allocation5], 4
      %s120 = int_to_ptr.vmem [resolvable:$true] %s119
      %122 = dma.vmem_to_hbm [thread:$0]  %s120, 64, %s3, [#allocation4]
    $region21: #{tpu_custom_call.1} parent=1 // pred_fallthru
      _
    // Predicated region
    $region22: #{tpu_custom_call.1} parent=1 // pred_check
      _
    $region23: #{tpu_custom_call.1} parent=1 // pred_check_branch
      %124 = sbr.rel (0) target = $region25
    $region24: #{tpu_custom_call.1} parent=1 // pred_region
      %125 = dma.done [#allocation4], 64
    $region25: #{tpu_custom_call.1} parent=1 // pred_fallthru
      _
    %126 = vsyncpa [#allocation3], 1
    %127 = vsyncpa [#allocation4], 1

</llo_original>
